<compile_context>
chip_gen: v5e
topology: v5e:2x2
jax: 0.10.0
libtpu: 0.0.40
codegen_flags: <defaults>
</compile_context>

<pallas_src>
from functools import partial

import jax
import jax.numpy as jnp
from jax import lax
from jax.experimental import pallas as pl
from jax.experimental.pallas import tpu as pltpu

KERNEL_SIZE = 3
LN_EPS = 1e-5


# --------------------------------- kernel -------------------------------------
def cls_head_kernel(x_ref, m_ref,
                    w1_ref, g1_ref, b1_ref,
                    w2_ref, g2_ref, b2_ref,
                    wc_ref, bc_ref,
                    out_ref, *, valid_len):
    """One FPN window.

    x_ref : (D, Tp) bf16   channels on sublanes, positions on lanes
    m_ref : (1, Tp) f32    data mask (0 in the lane-pad region)
    w1/w2 : (3, D, D) bf16 per-tap conv weights [k=0 | k=1 | k=2]
    g*/b* : (D, 1)  f32    LayerNorm affine
    wc    : (3, D, 1) f32  cls-conv per-tap weights
    bc    : (1, 1)  f32    cls bias (SMEM scalar)
    out   : (1, Tp) f32    logits (lane dense)
    valid_len : static true window length T (<= Tp)
    """
    x = x_ref[...]
    m = m_ref[...]
    tp = x.shape[1]

    # Window-edge tap-validity masks (emulate the conv's zero padding at
    # positions -1 and valid_len).  Static iota -> VPU only.
    pos = lax.broadcasted_iota(jnp.int32, (1, tp), 1)
    pm = (pos > 0).astype(jnp.float32)                 # t-1 tap exists
    nm = (pos < valid_len - 1).astype(jnp.float32)     # t+1 tap exists

    def conv3(h_bf16, w_ref):
        # k=3 "same" conv as three K=D MXU matmuls combined with lane rolls.
        # No (3D, Tp) intermediate is ever materialized.
        y0 = jnp.dot(w_ref[0], h_bf16, preferred_element_type=jnp.float32)
        y1 = jnp.dot(w_ref[1], h_bf16, preferred_element_type=jnp.float32)
        y2 = jnp.dot(w_ref[2], h_bf16, preferred_element_type=jnp.float32)
        return (pltpu.roll(y0, shift=1, axis=1) * pm           # y0[t-1]
                + y1
                + pltpu.roll(y2, shift=tp - 1, axis=1) * nm)   # y2[t+1]

    def ln_relu(y, g, b):
        # One-pass LayerNorm over channels (sublane axis), then ReLU.
        mu = jnp.mean(y, axis=0, keepdims=True)
        var = jnp.mean(y * y, axis=0, keepdims=True) - mu * mu
        return jnp.maximum((y - mu) * lax.rsqrt(var + LN_EPS) * g + b, 0.0)

    # layer 1: masked conv -> ReLU(LayerNorm)
    h = ln_relu(conv3(x, w1_ref) * m, g1_ref[...], b1_ref[...])
    # layer 2
    h = ln_relu(conv3(h.astype(jnp.bfloat16), w2_ref) * m, g2_ref[...], b2_ref[...])

    # cls head (D -> 1): per-tap weighted channel (sublane) reductions of the
    # live h -> three (1, Tp) rows, rolled and summed.
    s0 = jnp.sum(h * wc_ref[0], axis=0, keepdims=True)
    s1 = jnp.sum(h * wc_ref[1], axis=0, keepdims=True)
    s2 = jnp.sum(h * wc_ref[2], axis=0, keepdims=True)
    logits = (pltpu.roll(s0, shift=1, axis=1) * pm
              + s1
              + pltpu.roll(s2, shift=tp - 1, axis=1) * nm
              + bc_ref[0, 0])
    out_ref[...] = (logits * m).astype(out_ref.dtype)


def _run_level(xw, mw, kparams, *, valid_len):
    """xw: (BW, D, T_pad) bf16; mw: (BW, 1, T_pad) f32 -> (BW, 1, T_pad) f32 logits."""
    w1, g1, b1, w2, g2, b2, wc, bc = kparams
    BW, D, T_pad = xw.shape

    flops = BW * T_pad * (12 * D * D + 6 * D)          # 2 hidden convs + cls
    bytes_accessed = int(xw.size * 2 + mw.size * 4
                         + (w1.size + w2.size) * 2
                         + (g1.size + b1.size + g2.size + b2.size
                            + wc.size + bc.size) * 4
                         + BW * T_pad * 4)
    cost = pl.CostEstimate(flops=flops,
                           transcendentals=2 * BW * T_pad,
                           bytes_accessed=bytes_accessed)

    return pl.pallas_call(
        partial(cls_head_kernel, valid_len=valid_len),
        out_shape=jax.ShapeDtypeStruct((BW, 1, T_pad), jnp.float32),
        grid=(BW,),
        in_specs=[
            pl.BlockSpec((None, D, T_pad), lambda i: (i, 0, 0)),   # x window
            pl.BlockSpec((None, 1, T_pad), lambda i: (i, 0, 0)),   # mask window
            pl.BlockSpec((3, D, D), lambda i: (0, 0, 0)),          # w1 (resident)
            pl.BlockSpec((D, 1), lambda i: (0, 0)),                # gamma1
            pl.BlockSpec((D, 1), lambda i: (0, 0)),                # beta1
            pl.BlockSpec((3, D, D), lambda i: (0, 0, 0)),          # w2 (resident)
            pl.BlockSpec((D, 1), lambda i: (0, 0)),                # gamma2
            pl.BlockSpec((D, 1), lambda i: (0, 0)),                # beta2
            pl.BlockSpec((3, D, 1), lambda i: (0, 0, 0)),          # w_cls
            pl.BlockSpec(memory_space=pltpu.MemorySpace.SMEM),     # b_cls scalar
        ],
        out_specs=pl.BlockSpec((None, 1, T_pad), lambda i: (i, 0, 0)),
        compiler_params=pltpu.CompilerParams(
            dimension_semantics=("parallel",),          # windows -> both v7x TCs
            vmem_limit_bytes=64 * 1024 * 1024),
        cost_estimate=cost,
    )(xw, mw, w1, g1, b1, w2, g2, b2, wc, bc)


# ------------------------------ module forward --------------------------------
def prepare_params(w1t, g1, b1, w2t, g2, b2, wct, bct):
    """Torch layouts -> kernel layouts.
    w*t: (Cout, Cin, 3) conv weights; g*/b*: (D,); wct: (1, D, 3); bct: (1,)."""
    def taps(w, dtype):   # (Cout, Cin, 3) -> (3, Cout, Cin)
        return jnp.transpose(w, (2, 0, 1)).astype(dtype)
    return (taps(w1t, jnp.bfloat16), g1.reshape(-1, 1), b1.reshape(-1, 1),
            taps(w2t, jnp.bfloat16), g2.reshape(-1, 1), b2.reshape(-1, 1),
            jnp.transpose(wct, (2, 1, 0)).astype(jnp.float32),     # (3, D, 1)
            bct.reshape(1, 1).astype(jnp.float32))


def cls_head_forward(kparams, fpn, fpn_masks):
    """Mirrors ClsHead.forward.
    fpn[l]: (bs, nw, D, vlen); fpn_masks[l]: (bs, nw, 1, vlen) bool."""
    out_logits, out_masks = (), ()
    for x, mask in zip(fpn, fpn_masks):
        bs, nw, d, T = x.shape
        BW = bs * nw
        T_pad = max(128, ((T + 127) // 128) * 128)     # lane-align positions
        xw = x.reshape(BW, d, T).astype(jnp.bfloat16)  # natural layout, bf16 MXU operand
        mw = mask.reshape(BW, 1, T).astype(jnp.float32)
        if T_pad != T:
            xw = jnp.pad(xw, ((0, 0), (0, 0), (0, T_pad - T)))
            mw = jnp.pad(mw, ((0, 0), (0, 0), (0, T_pad - T)))

        logits = _run_level(xw, mw, kparams, valid_len=T)   # (BW, 1, T_pad)

        out_logits += (logits[:, 0, :T].reshape(bs, nw, T),)
        out_masks += (mask.reshape(bs, nw, T),)        # stride=1 -> mask passes through
    return out_logits, out_masks


# ------------------------------ pure-JAX reference -----------------------------
def _ref_forward(tparams, fpn, fpn_masks):
    """Torch Conv1d / channel-LayerNorm semantics.  The hidden-conv operands
    are rounded to bf16 (accumulation in f32) to emulate the kernel's MXU
    precision, so the comparison tolerance can stay tight."""
    w1, g1, b1, w2, g2, b2, wc, bc = tparams
    hi = lax.Precision.HIGHEST

    def conv(x, w, bias=None, emulate_bf16=False):
        if emulate_bf16:
            x = x.astype(jnp.bfloat16).astype(jnp.float32)
            w = w.astype(jnp.bfloat16).astype(jnp.float32)
        xp = jnp.pad(x, ((0, 0), (0, 0), (1, 1)))
        y = (jnp.einsum('bit,oi->bot', xp[:, :, :-2], w[:, :, 0], precision=hi) +
             jnp.einsum('bit,oi->bot', xp[:, :, 1:-1], w[:, :, 1], precision=hi) +
             jnp.einsum('bit,oi->bot', xp[:, :, 2:], w[:, :, 2], precision=hi))
        if bias is not None:
            y = y + bias[None, :, None]
        return y

    def ln(x, g, b):
        mu = x.mean(1, keepdims=True)
        var = ((x - mu) ** 2).mean(1, keepdims=True)
        return (x - mu) / jnp.sqrt(var + LN_EPS) * g[None, :, None] + b[None, :, None]

    outs = []
    for x, mask in zip(fpn, fpn_masks):
        bs, nw, d, T = x.shape
        h = x.reshape(bs * nw, d, T)
        mb = mask.reshape(bs * nw, 1, T).astype(jnp.float32)
        h = jax.nn.relu(ln(conv(h, w1, emulate_bf16=True) * mb, g1, b1))
        h = jax.nn.relu(ln(conv(h, w2, emulate_bf16=True) * mb, g2, b2))
        logits = (conv(h, wc, bc) * mb)[:, 0, :]
        outs.append(logits.reshape(bs, nw, T))
    return outs


# ----------------------------------- main --------------------------------------
if __name__ == "__main__":
    key = jax.random.PRNGKey(0)
    bs, nw, D = 2, 3, 32
    vlens = [16, 8]                       # two FPN levels

    ks = jax.random.split(key, 8)
    # Deterministic synthetic parameters in PyTorch layouts.
    w1t = jax.random.normal(ks[0], (D, D, KERNEL_SIZE), jnp.float32) * 0.05
    w2t = jax.random.normal(ks[1], (D, D, KERNEL_SIZE), jnp.float32) * 0.05
    wct = jax.random.normal(ks[2], (1, D, KERNEL_SIZE), jnp.float32) * 0.05
    g1 = 1.0 + 0.1 * jax.random.normal(ks[3], (D,), jnp.float32)
    b1 = 0.1 * jax.random.normal(ks[4], (D,), jnp.float32)
    g2 = 1.0 + 0.1 * jax.random.normal(ks[5], (D,), jnp.float32)
    b2 = 0.1 * jax.random.normal(ks[6], (D,), jnp.float32)
    bct = jnp.zeros((1,), jnp.float32)    # prior_prob=0 -> bias_init = 0

    tparams = (w1t, g1, b1, w2t, g2, b2, wct, bct)
    kparams = prepare_params(*tparams)

    fpn, fpn_masks = [], []
    for li, T in enumerate(vlens):
        kx = jax.random.fold_in(ks[7], li)
        x = jax.random.normal(kx, (bs, nw, D, T), jnp.float32)
        lengths = (jnp.arange(bs * nw).reshape(bs, nw) % T) + T // 2
        t_idx = jnp.arange(T)
        mask = t_idx[None, None, None, :] < lengths[:, :, None, None]   # (bs,nw,1,T) bool
        fpn.append(x)
        fpn_masks.append(mask)

    out_logits, out_masks = cls_head_forward(kparams, fpn, fpn_masks)
    jax.block_until_ready(out_logits)

    # sanity check against a pure-JAX reference (torch conv/LN semantics,
    # bf16 MXU-operand emulation for the two hidden convs)
    refs = _ref_forward(tparams, fpn, fpn_masks)
    for li, ref in enumerate(refs):
        assert out_logits[li].shape == ref.shape
        assert jnp.allclose(out_logits[li], ref, atol=5e-3, rtol=5e-3), \
            f"level {li} mismatch: max abs err {jnp.max(jnp.abs(out_logits[li] - ref))}"
        assert out_masks[li].shape == (bs, nw, vlens[li])

    print("KERNEL_OK")
</pallas_src>

<mosaic_0001>
module attributes {stable_mosaic.version = 11 : i64} {
  func.func @cls_head_kernel(%arg0: i32, %arg1: memref<1x32x128xbf16, #tpu.memory_space<vmem>>, %arg2: memref<1x1x128xf32, #tpu.memory_space<vmem>>, %arg3: memref<3x32x32xbf16, #tpu.memory_space<vmem>>, %arg4: memref<32x1xf32, #tpu.memory_space<vmem>>, %arg5: memref<32x1xf32, #tpu.memory_space<vmem>>, %arg6: memref<3x32x32xbf16, #tpu.memory_space<vmem>>, %arg7: memref<32x1xf32, #tpu.memory_space<vmem>>, %arg8: memref<32x1xf32, #tpu.memory_space<vmem>>, %arg9: memref<3x32x1xf32, #tpu.memory_space<vmem>>, %arg10: memref<1x1xf32, #tpu.memory_space<smem>>, %arg11: memref<1x1x128xf32, #tpu.memory_space<vmem>>) attributes {dimension_semantics = [#tpu.dimension_semantics<parallel>], iteration_bounds = array<i64: 6>, scalar_prefetch = 0 : i64, scratch_operands = 0 : i64, tpu.core_type = #tpu.core_type<tc>, window_params = [{transform_indices = @transform_0, window_bounds = array<i64: 1, 32, 128>}, {transform_indices = @transform_1, window_bounds = array<i64: 1, 1, 128>}, {pipeline_mode = #tpu.pipeline_mode<synchronous>, transform_indices = @transform_2, window_bounds = array<i64: 3, 32, 32>}, {pipeline_mode = #tpu.pipeline_mode<synchronous>, transform_indices = @transform_3, window_bounds = array<i64: 32, 1>}, {pipeline_mode = #tpu.pipeline_mode<synchronous>, transform_indices = @transform_4, window_bounds = array<i64: 32, 1>}, {pipeline_mode = #tpu.pipeline_mode<synchronous>, transform_indices = @transform_5, window_bounds = array<i64: 3, 32, 32>}, {pipeline_mode = #tpu.pipeline_mode<synchronous>, transform_indices = @transform_6, window_bounds = array<i64: 32, 1>}, {pipeline_mode = #tpu.pipeline_mode<synchronous>, transform_indices = @transform_7, window_bounds = array<i64: 32, 1>}, {pipeline_mode = #tpu.pipeline_mode<synchronous>, transform_indices = @transform_8, window_bounds = array<i64: 3, 32, 1>}, {transform_indices = @transform_9, window_bounds = array<i64: 1, 1>}, {transform_indices = @transform_10, window_bounds = array<i64: 1, 1, 128>}]} {
    %c0 = arith.constant 0 : index
    %c0_0 = arith.constant 0 : index
    %c0_1 = arith.constant 0 : index
    %0 = vector.load %arg1[%c0, %c0_0, %c0_1] : memref<1x32x128xbf16, #tpu.memory_space<vmem>>, vector<1x32x128xbf16>
    %1 = vector.shape_cast %0 : vector<1x32x128xbf16> to vector<32x128xbf16>
    %c0_2 = arith.constant 0 : index
    %c0_3 = arith.constant 0 : index
    %c0_4 = arith.constant 0 : index
    %2 = vector.load %arg2[%c0_2, %c0_3, %c0_4] : memref<1x1x128xf32, #tpu.memory_space<vmem>>, vector<1x1x128xf32>
    %3 = vector.shape_cast %2 : vector<1x1x128xf32> to vector<1x128xf32>
    %4 = tpu.iota {dimensions = array<i32: 1>} : vector<1x128xi32>
    %c0_i32 = arith.constant 0 : i32
    %5 = vector.broadcast %c0_i32 : i32 to vector<1x128xi32>
    %6 = arith.cmpi sgt, %4, %5 : vector<1x128xi32>
    %7 = arith.extui %6 : vector<1x128xi1> to vector<1x128xi32>
    %8 = arith.sitofp %7 : vector<1x128xi32> to vector<1x128xf32>
    %c15_i32 = arith.constant 15 : i32
    %9 = vector.broadcast %c15_i32 : i32 to vector<1x128xi32>
    %10 = arith.cmpi slt, %4, %9 : vector<1x128xi32>
    %11 = arith.extui %10 : vector<1x128xi1> to vector<1x128xi32>
    %12 = arith.sitofp %11 : vector<1x128xi32> to vector<1x128xf32>
    %c0_5 = arith.constant 0 : index
    %c0_6 = arith.constant 0 : index
    %c0_7 = arith.constant 0 : index
    %13 = vector.load %arg3[%c0_5, %c0_6, %c0_7] : memref<3x32x32xbf16, #tpu.memory_space<vmem>>, vector<1x32x32xbf16>
    %14 = vector.shape_cast %13 : vector<1x32x32xbf16> to vector<32x32xbf16>
    %cst = arith.constant dense<0.000000e+00> : vector<32x128xf32>
    %15 = tpu.matmul %14, %1, %cst {dimension_numbers = #tpu.dot_dimension_numbers<[1], [0], [0], [1], [0, 0, 1, 1], [], []>} : vector<32x32xbf16>, vector<32x128xbf16>, vector<32x128xf32> -> vector<32x128xf32>
    %c1 = arith.constant 1 : index
    %c0_8 = arith.constant 0 : index
    %c0_9 = arith.constant 0 : index
    %16 = vector.load %arg3[%c1, %c0_8, %c0_9] : memref<3x32x32xbf16, #tpu.memory_space<vmem>>, vector<1x32x32xbf16>
    %17 = vector.shape_cast %16 : vector<1x32x32xbf16> to vector<32x32xbf16>
    %cst_10 = arith.constant dense<0.000000e+00> : vector<32x128xf32>
    %18 = tpu.matmul %17, %1, %cst_10 {dimension_numbers = #tpu.dot_dimension_numbers<[1], [0], [0], [1], [0, 0, 1, 1], [], []>} : vector<32x32xbf16>, vector<32x128xbf16>, vector<32x128xf32> -> vector<32x128xf32>
    %c2 = arith.constant 2 : index
    %c0_11 = arith.constant 0 : index
    %c0_12 = arith.constant 0 : index
    %19 = vector.load %arg3[%c2, %c0_11, %c0_12] : memref<3x32x32xbf16, #tpu.memory_space<vmem>>, vector<1x32x32xbf16>
    %20 = vector.shape_cast %19 : vector<1x32x32xbf16> to vector<32x32xbf16>
    %cst_13 = arith.constant dense<0.000000e+00> : vector<32x128xf32>
    %21 = tpu.matmul %20, %1, %cst_13 {dimension_numbers = #tpu.dot_dimension_numbers<[1], [0], [0], [1], [0, 0, 1, 1], [], []>} : vector<32x32xbf16>, vector<32x128xbf16>, vector<32x128xf32> -> vector<32x128xf32>
    %c1_i32 = arith.constant 1 : i32
    %22 = tpu.dynamic_rotate %15 by %c1_i32 dim 1 : vector<32x128xf32>, i32 -> vector<32x128xf32>
    %23 = vector.broadcast %8 : vector<1x128xf32> to vector<32x128xf32>
    %24 = arith.mulf %22, %23 : vector<32x128xf32>
    %25 = arith.addf %24, %18 : vector<32x128xf32>
    %c127_i32 = arith.constant 127 : i32
    %26 = tpu.dynamic_rotate %21 by %c127_i32 dim 1 : vector<32x128xf32>, i32 -> vector<32x128xf32>
    %27 = vector.broadcast %12 : vector<1x128xf32> to vector<32x128xf32>
    %28 = arith.mulf %26, %27 : vector<32x128xf32>
    %29 = arith.addf %25, %28 : vector<32x128xf32>
    %30 = vector.broadcast %3 : vector<1x128xf32> to vector<32x128xf32>
    %31 = arith.mulf %29, %30 : vector<32x128xf32>
    %c0_14 = arith.constant 0 : index
    %c0_15 = arith.constant 0 : index
    %32 = vector.load %arg4[%c0_14, %c0_15] : memref<32x1xf32, #tpu.memory_space<vmem>>, vector<32x1xf32>
    %c0_16 = arith.constant 0 : index
    %c0_17 = arith.constant 0 : index
    %33 = vector.load %arg5[%c0_16, %c0_17] : memref<32x1xf32, #tpu.memory_space<vmem>>, vector<32x1xf32>
    %cst_18 = arith.constant dense<0.000000e+00> : vector<128xf32>
    %34 = vector.multi_reduction <add>, %31, %cst_18 [0] : vector<32x128xf32> to vector<128xf32>
    %35 = vector.shape_cast %34 : vector<128xf32> to vector<1x128xf32>
    %cst_19 = arith.constant 3.200000e+01 : f32
    %36 = vector.broadcast %cst_19 : f32 to vector<1x128xf32>
    %37 = arith.divf %35, %36 : vector<1x128xf32>
    %38 = arith.mulf %31, %31 : vector<32x128xf32>
    %cst_20 = arith.constant dense<0.000000e+00> : vector<128xf32>
    %39 = vector.multi_reduction <add>, %38, %cst_20 [0] : vector<32x128xf32> to vector<128xf32>
    %40 = vector.shape_cast %39 : vector<128xf32> to vector<1x128xf32>
    %cst_21 = arith.constant 3.200000e+01 : f32
    %41 = vector.broadcast %cst_21 : f32 to vector<1x128xf32>
    %42 = arith.divf %40, %41 : vector<1x128xf32>
    %43 = arith.mulf %37, %37 : vector<1x128xf32>
    %44 = arith.subf %42, %43 : vector<1x128xf32>
    %45 = vector.broadcast %37 : vector<1x128xf32> to vector<32x128xf32>
    %46 = arith.subf %31, %45 : vector<32x128xf32>
    %cst_22 = arith.constant 9.99999974E-6 : f32
    %47 = vector.broadcast %cst_22 : f32 to vector<1x128xf32>
    %48 = arith.addf %44, %47 : vector<1x128xf32>
    %49 = math.rsqrt %48 : vector<1x128xf32>
    %50 = vector.broadcast %49 : vector<1x128xf32> to vector<32x128xf32>
    %51 = arith.mulf %46, %50 : vector<32x128xf32>
    %52 = vector.broadcast %32 : vector<32x1xf32> to vector<32x128xf32>
    %53 = arith.mulf %51, %52 : vector<32x128xf32>
    %54 = vector.broadcast %33 : vector<32x1xf32> to vector<32x128xf32>
    %55 = arith.addf %53, %54 : vector<32x128xf32>
    %cst_23 = arith.constant 0.000000e+00 : f32
    %56 = vector.broadcast %cst_23 : f32 to vector<32x128xf32>
    %57 = arith.maximumf %55, %56 : vector<32x128xf32>
    %58 = arith.truncf %57 : vector<32x128xf32> to vector<32x128xbf16>
    %c0_24 = arith.constant 0 : index
    %c0_25 = arith.constant 0 : index
    %c0_26 = arith.constant 0 : index
    %59 = vector.load %arg6[%c0_24, %c0_25, %c0_26] : memref<3x32x32xbf16, #tpu.memory_space<vmem>>, vector<1x32x32xbf16>
    %60 = vector.shape_cast %59 : vector<1x32x32xbf16> to vector<32x32xbf16>
    %cst_27 = arith.constant dense<0.000000e+00> : vector<32x128xf32>
    %61 = tpu.matmul %60, %58, %cst_27 {dimension_numbers = #tpu.dot_dimension_numbers<[1], [0], [0], [1], [0, 0, 1, 1], [], []>} : vector<32x32xbf16>, vector<32x128xbf16>, vector<32x128xf32> -> vector<32x128xf32>
    %c1_28 = arith.constant 1 : index
    %c0_29 = arith.constant 0 : index
    %c0_30 = arith.constant 0 : index
    %62 = vector.load %arg6[%c1_28, %c0_29, %c0_30] : memref<3x32x32xbf16, #tpu.memory_space<vmem>>, vector<1x32x32xbf16>
    %63 = vector.shape_cast %62 : vector<1x32x32xbf16> to vector<32x32xbf16>
    %cst_31 = arith.constant dense<0.000000e+00> : vector<32x128xf32>
    %64 = tpu.matmul %63, %58, %cst_31 {dimension_numbers = #tpu.dot_dimension_numbers<[1], [0], [0], [1], [0, 0, 1, 1], [], []>} : vector<32x32xbf16>, vector<32x128xbf16>, vector<32x128xf32> -> vector<32x128xf32>
    %c2_32 = arith.constant 2 : index
    %c0_33 = arith.constant 0 : index
    %c0_34 = arith.constant 0 : index
    %65 = vector.load %arg6[%c2_32, %c0_33, %c0_34] : memref<3x32x32xbf16, #tpu.memory_space<vmem>>, vector<1x32x32xbf16>
    %66 = vector.shape_cast %65 : vector<1x32x32xbf16> to vector<32x32xbf16>
    %cst_35 = arith.constant dense<0.000000e+00> : vector<32x128xf32>
    %67 = tpu.matmul %66, %58, %cst_35 {dimension_numbers = #tpu.dot_dimension_numbers<[1], [0], [0], [1], [0, 0, 1, 1], [], []>} : vector<32x32xbf16>, vector<32x128xbf16>, vector<32x128xf32> -> vector<32x128xf32>
    %c1_i32_36 = arith.constant 1 : i32
    %68 = tpu.dynamic_rotate %61 by %c1_i32_36 dim 1 : vector<32x128xf32>, i32 -> vector<32x128xf32>
    %69 = vector.broadcast %8 : vector<1x128xf32> to vector<32x128xf32>
    %70 = arith.mulf %68, %69 : vector<32x128xf32>
    %71 = arith.addf %70, %64 : vector<32x128xf32>
    %c127_i32_37 = arith.constant 127 : i32
    %72 = tpu.dynamic_rotate %67 by %c127_i32_37 dim 1 : vector<32x128xf32>, i32 -> vector<32x128xf32>
    %73 = vector.broadcast %12 : vector<1x128xf32> to vector<32x128xf32>
    %74 = arith.mulf %72, %73 : vector<32x128xf32>
    %75 = arith.addf %71, %74 : vector<32x128xf32>
    %76 = vector.broadcast %3 : vector<1x128xf32> to vector<32x128xf32>
    %77 = arith.mulf %75, %76 : vector<32x128xf32>
    %c0_38 = arith.constant 0 : index
    %c0_39 = arith.constant 0 : index
    %78 = vector.load %arg7[%c0_38, %c0_39] : memref<32x1xf32, #tpu.memory_space<vmem>>, vector<32x1xf32>
    %c0_40 = arith.constant 0 : index
    %c0_41 = arith.constant 0 : index
    %79 = vector.load %arg8[%c0_40, %c0_41] : memref<32x1xf32, #tpu.memory_space<vmem>>, vector<32x1xf32>
    %cst_42 = arith.constant dense<0.000000e+00> : vector<128xf32>
    %80 = vector.multi_reduction <add>, %77, %cst_42 [0] : vector<32x128xf32> to vector<128xf32>
    %81 = vector.shape_cast %80 : vector<128xf32> to vector<1x128xf32>
    %cst_43 = arith.constant 3.200000e+01 : f32
    %82 = vector.broadcast %cst_43 : f32 to vector<1x128xf32>
    %83 = arith.divf %81, %82 : vector<1x128xf32>
    %84 = arith.mulf %77, %77 : vector<32x128xf32>
    %cst_44 = arith.constant dense<0.000000e+00> : vector<128xf32>
    %85 = vector.multi_reduction <add>, %84, %cst_44 [0] : vector<32x128xf32> to vector<128xf32>
    %86 = vector.shape_cast %85 : vector<128xf32> to vector<1x128xf32>
    %cst_45 = arith.constant 3.200000e+01 : f32
    %87 = vector.broadcast %cst_45 : f32 to vector<1x128xf32>
    %88 = arith.divf %86, %87 : vector<1x128xf32>
    %89 = arith.mulf %83, %83 : vector<1x128xf32>
    %90 = arith.subf %88, %89 : vector<1x128xf32>
    %91 = vector.broadcast %83 : vector<1x128xf32> to vector<32x128xf32>
    %92 = arith.subf %77, %91 : vector<32x128xf32>
    %cst_46 = arith.constant 9.99999974E-6 : f32
    %93 = vector.broadcast %cst_46 : f32 to vector<1x128xf32>
    %94 = arith.addf %90, %93 : vector<1x128xf32>
    %95 = math.rsqrt %94 : vector<1x128xf32>
    %96 = vector.broadcast %95 : vector<1x128xf32> to vector<32x128xf32>
    %97 = arith.mulf %92, %96 : vector<32x128xf32>
    %98 = vector.broadcast %78 : vector<32x1xf32> to vector<32x128xf32>
    %99 = arith.mulf %97, %98 : vector<32x128xf32>
    %100 = vector.broadcast %79 : vector<32x1xf32> to vector<32x128xf32>
    %101 = arith.addf %99, %100 : vector<32x128xf32>
    %cst_47 = arith.constant 0.000000e+00 : f32
    %102 = vector.broadcast %cst_47 : f32 to vector<32x128xf32>
    %103 = arith.maximumf %101, %102 : vector<32x128xf32>
    %c0_48 = arith.constant 0 : index
    %c0_49 = arith.constant 0 : index
    %c0_50 = arith.constant 0 : index
    %104 = vector.load %arg9[%c0_48, %c0_49, %c0_50] : memref<3x32x1xf32, #tpu.memory_space<vmem>>, vector<1x32x1xf32>
    %105 = vector.shape_cast %104 : vector<1x32x1xf32> to vector<32x1xf32>
    %106 = vector.broadcast %105 : vector<32x1xf32> to vector<32x128xf32>
    %107 = arith.mulf %103, %106 : vector<32x128xf32>
    %cst_51 = arith.constant dense<0.000000e+00> : vector<128xf32>
    %108 = vector.multi_reduction <add>, %107, %cst_51 [0] : vector<32x128xf32> to vector<128xf32>
    %109 = vector.shape_cast %108 : vector<128xf32> to vector<1x128xf32>
    %c1_52 = arith.constant 1 : index
    %c0_53 = arith.constant 0 : index
    %c0_54 = arith.constant 0 : index
    %110 = vector.load %arg9[%c1_52, %c0_53, %c0_54] : memref<3x32x1xf32, #tpu.memory_space<vmem>>, vector<1x32x1xf32>
    %111 = vector.shape_cast %110 : vector<1x32x1xf32> to vector<32x1xf32>
    %112 = vector.broadcast %111 : vector<32x1xf32> to vector<32x128xf32>
    %113 = arith.mulf %103, %112 : vector<32x128xf32>
    %cst_55 = arith.constant dense<0.000000e+00> : vector<128xf32>
    %114 = vector.multi_reduction <add>, %113, %cst_55 [0] : vector<32x128xf32> to vector<128xf32>
    %115 = vector.shape_cast %114 : vector<128xf32> to vector<1x128xf32>
    %c2_56 = arith.constant 2 : index
    %c0_57 = arith.constant 0 : index
    %c0_58 = arith.constant 0 : index
    %116 = vector.load %arg9[%c2_56, %c0_57, %c0_58] : memref<3x32x1xf32, #tpu.memory_space<vmem>>, vector<1x32x1xf32>
    %117 = vector.shape_cast %116 : vector<1x32x1xf32> to vector<32x1xf32>
    %118 = vector.broadcast %117 : vector<32x1xf32> to vector<32x128xf32>
    %119 = arith.mulf %103, %118 : vector<32x128xf32>
    %cst_59 = arith.constant dense<0.000000e+00> : vector<128xf32>
    %120 = vector.multi_reduction <add>, %119, %cst_59 [0] : vector<32x128xf32> to vector<128xf32>
    %121 = vector.shape_cast %120 : vector<128xf32> to vector<1x128xf32>
    %c1_i32_60 = arith.constant 1 : i32
    %122 = tpu.dynamic_rotate %109 by %c1_i32_60 dim 1 : vector<1x128xf32>, i32 -> vector<1x128xf32>
    %123 = arith.mulf %122, %8 : vector<1x128xf32>
    %124 = arith.addf %123, %115 : vector<1x128xf32>
    %c127_i32_61 = arith.constant 127 : i32
    %125 = tpu.dynamic_rotate %121 by %c127_i32_61 dim 1 : vector<1x128xf32>, i32 -> vector<1x128xf32>
    %126 = arith.mulf %125, %12 : vector<1x128xf32>
    %127 = arith.addf %124, %126 : vector<1x128xf32>
    %c0_62 = arith.constant 0 : index
    %c0_63 = arith.constant 0 : index
    %128 = memref.load %arg10[%c0_62, %c0_63] : memref<1x1xf32, #tpu.memory_space<smem>>
    %129 = vector.broadcast %128 : f32 to vector<1x128xf32>
    %130 = arith.addf %127, %129 : vector<1x128xf32>
    %131 = arith.mulf %130, %3 : vector<1x128xf32>
    %c0_64 = arith.constant 0 : index
    %c0_65 = arith.constant 0 : index
    %c0_66 = arith.constant 0 : index
    %132 = vector.load %arg11[%c0_64, %c0_65, %c0_66] : memref<1x1x128xf32, #tpu.memory_space<vmem>>, vector<1x1x128xf32>
    %133 = vector.shape_cast %132 : vector<1x1x128xf32> to vector<1x128xf32>
    %134 = vector.shape_cast %131 : vector<1x128xf32> to vector<1x1x128xf32>
    tpu.vector_store %arg11[%c0_64, %c0_65, %c0_66], %134 {strides = array<i32>} : memref<1x1x128xf32, #tpu.memory_space<vmem>>, vector<1x1x128xf32>,
    return
  }
  func.func @transform_0(%arg0: i32) -> (i32, i32, i32) {
    %c0_i32 = arith.constant 0 : i32
    %c0_i32_0 = arith.constant 0 : i32
    %c0_i32_1 = arith.constant 0 : i32
    return %arg0, %c0_i32, %c0_i32_0 : i32, i32, i32
  }
  func.func @transform_1(%arg0: i32) -> (i32, i32, i32) {
    %c0_i32 = arith.constant 0 : i32
    %c0_i32_0 = arith.constant 0 : i32
    %c0_i32_1 = arith.constant 0 : i32
    return %arg0, %c0_i32, %c0_i32_0 : i32, i32, i32
  }
  func.func @transform_2(%arg0: i32) -> (i32, i32, i32) {
    %c0_i32 = arith.constant 0 : i32
    %c0_i32_0 = arith.constant 0 : i32
    %c0_i32_1 = arith.constant 0 : i32
    %c0_i32_2 = arith.constant 0 : i32
    return %c0_i32, %c0_i32_0, %c0_i32_1 : i32, i32, i32
  }
  func.func @transform_3(%arg0: i32) -> (i32, i32) {
    %c0_i32 = arith.constant 0 : i32
    %c0_i32_0 = arith.constant 0 : i32
    %c0_i32_1 = arith.constant 0 : i32
    return %c0_i32, %c0_i32_0 : i32, i32
  }
  func.func @transform_4(%arg0: i32) -> (i32, i32) {
    %c0_i32 = arith.constant 0 : i32
    %c0_i32_0 = arith.constant 0 : i32
    %c0_i32_1 = arith.constant 0 : i32
    return %c0_i32, %c0_i32_0 : i32, i32
  }
  func.func @transform_5(%arg0: i32) -> (i32, i32, i32) {
    %c0_i32 = arith.constant 0 : i32
    %c0_i32_0 = arith.constant 0 : i32
    %c0_i32_1 = arith.constant 0 : i32
    %c0_i32_2 = arith.constant 0 : i32
    return %c0_i32, %c0_i32_0, %c0_i32_1 : i32, i32, i32
  }
  func.func @transform_6(%arg0: i32) -> (i32, i32) {
    %c0_i32 = arith.constant 0 : i32
    %c0_i32_0 = arith.constant 0 : i32
    %c0_i32_1 = arith.constant 0 : i32
    return %c0_i32, %c0_i32_0 : i32, i32
  }
  func.func @transform_7(%arg0: i32) -> (i32, i32) {
    %c0_i32 = arith.constant 0 : i32
    %c0_i32_0 = arith.constant 0 : i32
    %c0_i32_1 = arith.constant 0 : i32
    return %c0_i32, %c0_i32_0 : i32, i32
  }
  func.func @transform_8(%arg0: i32) -> (i32, i32, i32) {
    %c0_i32 = arith.constant 0 : i32
    %c0_i32_0 = arith.constant 0 : i32
    %c0_i32_1 = arith.constant 0 : i32
    %c0_i32_2 = arith.constant 0 : i32
    return %c0_i32, %c0_i32_0, %c0_i32_1 : i32, i32, i32
  }
  func.func @transform_9(%arg0: i32) -> (i32, i32) {
    %c0_i32 = arith.constant 0 : i32
    %c0_i32_0 = arith.constant 0 : i32
    %c0_i32_1 = arith.constant 0 : i32
    return %c0_i32, %c0_i32_0 : i32, i32
  }
  func.func @transform_10(%arg0: i32) -> (i32, i32, i32) {
    %c0_i32 = arith.constant 0 : i32
    %c0_i32_0 = arith.constant 0 : i32
    %c0_i32_1 = arith.constant 0 : i32
    return %arg0, %c0_i32, %c0_i32_0 : i32, i32, i32
  }
}

</mosaic_0001>

<llo_original>
// kernel: tpu_custom_call.1
$region0: #{tpu_custom_call.1}
  #allocation0 [shape = 'u32[]', space=smem, size = 0x4, offset = 0x4, fixed_abs, tag = 'smem constant byte address 0x4 - core index']
  #allocation1 [shape = 'u32[72,128]{1,0:T(1,128)}', space=vmem, size = 0x9000, scoped, tag = 'internal scratch']
  #allocation2 [shape = 'f32[1,1]{1,0:T(1,128)S(6)}', space=smem, size = 0x200, scoped, tag = 'scoped memory for tpu_custom_call.1']
  %s0 = inlined_call_operand.vmem [shape: bf16[6,32,128], index: 0, kind: input, shape index: {}]
  %s1 = inlined_call_operand.vmem [shape: f32[6,1,128], index: 1, kind: input, shape index: {}]
  %s2 = inlined_call_operand.vmem [shape: bf16[3,32,32], index: 2, kind: input, shape index: {}]
  %s3 = inlined_call_operand.vmem [shape: f32[32,1], index: 3, kind: input, shape index: {}]
  %s4 = inlined_call_operand.vmem [shape: f32[32,1], index: 4, kind: input, shape index: {}]
  %s5 = inlined_call_operand.vmem [shape: bf16[3,32,32], index: 5, kind: input, shape index: {}]
  %s6 = inlined_call_operand.vmem [shape: f32[32,1], index: 6, kind: input, shape index: {}]
  %s7 = inlined_call_operand.vmem [shape: f32[32,1], index: 7, kind: input, shape index: {}]
  %s8 = inlined_call_operand.vmem [shape: f32[3,32,1], index: 8, kind: input, shape index: {}]
  %s9 = inlined_call_operand.<no memory space> [shape: f32[1,1], index: 9, kind: input, shape index: {}]
  %s10 = inlined_call_operand.hbm [shape: f32[6,1,128], index: 10, kind: output, shape index: {}]
  %s11 = sld [smem:[#allocation0]]
  $region73: #{tpu_custom_call.1} parent=0
    _
  %s13 = ssub.s32 1, %s11
  %s14 = scalar_select 0, %s13, %s11
  %15 = sst [smem:[#allocation2]] %s9
  $region1: #{tpu_custom_call.1} parent=0
    #allocation3 [shape = 'u8[1024]{0}', space=vmem, size = 0x400, scoped, tag = 'output window, operand 0']
    #allocation4 [shape = 's32[2]{0}', space=sflag, size = 0x8, scoped, tag = 'scoped memory for tpu_custom_call.1']
    %16 = vsyncpa [#allocation4], 0
    %s17 = scalar_lea.sflag [#allocation4], 1
    %18 = vsyncpa %s17, 0
    loop: start=0, step=1, limit=8
    $region2: #{tpu_custom_call.1} parent=1 // loop_pre_header
      _
    $region3: #{tpu_custom_call.1} parent=1 // loop_header
      %s20 = sphi 0, %s24
      %p21 = scmp.ge.s32.totalorder %s20, 8
      %s30 = sphi 0, %s32
      %s33 = sphi 0, %s30
      %s34 = sphi 0, %s33
      %s50 = sphi 0, %s34
      %s56 = sphi 0, %s58
      %s59 = sphi 0, %s56
      %s60 = sphi 0, %s59
      %s76 = sphi 0, %s60
      %s80 = sphi 0, %s80
      %s82 = sphi 0, %s80
      %s83 = sphi 0, %s82
      %s97 = sphi 0, %s83
      %s101 = sphi 0, %s101
      %s103 = sphi 0, %s101
      %s104 = sphi 0, %s103
      %s118 = sphi 0, %s104
      %s122 = sphi 0, %s122
      %s124 = sphi 0, %s122
      %s125 = sphi 0, %s124
      %s139 = sphi 0, %s125
      %s143 = sphi 0, %s143
      %s145 = sphi 0, %s143
      %s146 = sphi 0, %s145
      %s160 = sphi 0, %s146
      %s164 = sphi 0, %s164
      %s166 = sphi 0, %s164
      %s167 = sphi 0, %s166
      %s181 = sphi 0, %s167
      %s185 = sphi 0, %s185
      %s187 = sphi 0, %s185
      %s188 = sphi 0, %s187
      %s202 = sphi 0, %s188
      %s206 = sphi 0, %s206
      %s208 = sphi 0, %s206
      %s209 = sphi 0, %s208
      %s223 = sphi 0, %s209
      %s227 = sphi 0, %s227
      %s229 = sphi 0, %s227
      %s230 = sphi 0, %s229
      %s244 = sphi 0, %s230
      %s250 = sphi 0, %s252
      %s253 = sphi 0, %s250
      %s254 = sphi 0, %s253
      %s270 = sphi 0, %s254
    $region4: #{tpu_custom_call.1} parent=1 // loop_header_branch
      %23 = sbr.rel (%p21) target = $region8
    $region5: #{tpu_custom_call.1} parent=1 // loop_body
      %s25 = ssub.s32 %s20, 1
      %s26 = ssub.s32 %s20, 2
      %s27 = sadd.s32 %s20, 1
      %s28 = ssub.s32 %s20, %s27
      %p29 = scmp.eq.s32.totalorder %s28, 0
      %s31 = sadd.s32 %s30, 1
      %s32 = scalar_select %p29, %s30, %s31
      %p35 = pneg %p29
      %p36 = scmp.eq.s32.totalorder %s20, 5
      %p37 = por %p35, %p36
      %p38 = scmp.ne.s32.totalorder %s30, %s33
      %p39 = scmp.eq.s32.totalorder %s20, 0
      %p40 = por %p38, %p39
      %p41 = scmp.ne.s32.totalorder %s30, %s33
      %p42 = scmp.eq.s32.totalorder %s25, 5
      %p43 = por %p41, %p42
      %p44 = scmp.ne.s32.totalorder %s33, %s34
      %p45 = scmp.eq.s32.totalorder %s25, 0
      %p46 = por %p44, %p45
      %p47 = scmp.ne.s32.totalorder %s33, %s34
      %p48 = scmp.eq.s32.totalorder %s26, 5
      %p49 = por %p47, %p48
      %p51 = scmp.ne.s32.totalorder %s34, %s50
      %p52 = scmp.eq.s32.totalorder %s26, 0
      %p53 = por %p51, %p52
      %s54 = ssub.s32 %s20, %s27
      %p55 = scmp.eq.s32.totalorder %s54, 0
      %s57 = sadd.s32 %s56, 1
      %s58 = scalar_select %p55, %s56, %s57
      %p61 = pneg %p55
      %p62 = scmp.eq.s32.totalorder %s20, 5
      %p63 = por %p61, %p62
      %p64 = scmp.ne.s32.totalorder %s56, %s59
      %p65 = scmp.eq.s32.totalorder %s20, 0
      %p66 = por %p64, %p65
      %p67 = scmp.ne.s32.totalorder %s56, %s59
      %p68 = scmp.eq.s32.totalorder %s25, 5
      %p69 = por %p67, %p68
      %p70 = scmp.ne.s32.totalorder %s59, %s60
      %p71 = scmp.eq.s32.totalorder %s25, 0
      %p72 = por %p70, %p71
      %p73 = scmp.ne.s32.totalorder %s59, %s60
      %p74 = scmp.eq.s32.totalorder %s26, 5
      %p75 = por %p73, %p74
      %p77 = scmp.ne.s32.totalorder %s60, %s76
      %p78 = scmp.eq.s32.totalorder %s26, 0
      %p79 = por %p77, %p78
      %s81 = sadd.s32 %s80, 1
      %p84 = scmp.eq.s32.totalorder %s20, 5
      %p85 = scmp.ne.s32.totalorder %s80, %s82
      %p86 = scmp.eq.s32.totalorder %s20, 0
      %p87 = por %p85, %p86
      %p88 = scmp.ne.s32.totalorder %s80, %s82
      %p89 = scmp.eq.s32.totalorder %s25, 5
      %p90 = por %p88, %p89
      %p91 = scmp.ne.s32.totalorder %s82, %s83
      %p92 = scmp.eq.s32.totalorder %s25, 0
      %p93 = por %p91, %p92
      %p94 = scmp.ne.s32.totalorder %s82, %s83
      %p95 = scmp.eq.s32.totalorder %s26, 5
      %p96 = por %p94, %p95
      %p98 = scmp.ne.s32.totalorder %s83, %s97
      %p99 = scmp.eq.s32.totalorder %s26, 0
      %p100 = por %p98, %p99
      %s102 = sadd.s32 %s101, 1
      %p105 = scmp.eq.s32.totalorder %s20, 5
      %p106 = scmp.ne.s32.totalorder %s101, %s103
      %p107 = scmp.eq.s32.totalorder %s20, 0
      %p108 = por %p106, %p107
      %p109 = scmp.ne.s32.totalorder %s101, %s103
      %p110 = scmp.eq.s32.totalorder %s25, 5
      %p111 = por %p109, %p110
      %p112 = scmp.ne.s32.totalorder %s103, %s104
      %p113 = scmp.eq.s32.totalorder %s25, 0
      %p114 = por %p112, %p113
      %p115 = scmp.ne.s32.totalorder %s103, %s104
      %p116 = scmp.eq.s32.totalorder %s26, 5
      %p117 = por %p115, %p116
      %p119 = scmp.ne.s32.totalorder %s104, %s118
      %p120 = scmp.eq.s32.totalorder %s26, 0
      %p121 = por %p119, %p120
      %s123 = sadd.s32 %s122, 1
      %p126 = scmp.eq.s32.totalorder %s20, 5
      %p127 = scmp.ne.s32.totalorder %s122, %s124
      %p128 = scmp.eq.s32.totalorder %s20, 0
      %p129 = por %p127, %p128
      %p130 = scmp.ne.s32.totalorder %s122, %s124
      %p131 = scmp.eq.s32.totalorder %s25, 5
      %p132 = por %p130, %p131
      %p133 = scmp.ne.s32.totalorder %s124, %s125
      %p134 = scmp.eq.s32.totalorder %s25, 0
      %p135 = por %p133, %p134
      %p136 = scmp.ne.s32.totalorder %s124, %s125
      %p137 = scmp.eq.s32.totalorder %s26, 5
      %p138 = por %p136, %p137
      %p140 = scmp.ne.s32.totalorder %s125, %s139
      %p141 = scmp.eq.s32.totalorder %s26, 0
      %p142 = por %p140, %p141
      %s144 = sadd.s32 %s143, 1
      %p147 = scmp.eq.s32.totalorder %s20, 5
      %p148 = scmp.ne.s32.totalorder %s143, %s145
      %p149 = scmp.eq.s32.totalorder %s20, 0
      %p150 = por %p148, %p149
      %p151 = scmp.ne.s32.totalorder %s143, %s145
      %p152 = scmp.eq.s32.totalorder %s25, 5
      %p153 = por %p151, %p152
      %p154 = scmp.ne.s32.totalorder %s145, %s146
      %p155 = scmp.eq.s32.totalorder %s25, 0
      %p156 = por %p154, %p155
      %p157 = scmp.ne.s32.totalorder %s145, %s146
      %p158 = scmp.eq.s32.totalorder %s26, 5
      %p159 = por %p157, %p158
      %p161 = scmp.ne.s32.totalorder %s146, %s160
      %p162 = scmp.eq.s32.totalorder %s26, 0
      %p163 = por %p161, %p162
      %s165 = sadd.s32 %s164, 1
      %p168 = scmp.eq.s32.totalorder %s20, 5
      %p169 = scmp.ne.s32.totalorder %s164, %s166
      %p170 = scmp.eq.s32.totalorder %s20, 0
      %p171 = por %p169, %p170
      %p172 = scmp.ne.s32.totalorder %s164, %s166
      %p173 = scmp.eq.s32.totalorder %s25, 5
      %p174 = por %p172, %p173
      %p175 = scmp.ne.s32.totalorder %s166, %s167
      %p176 = scmp.eq.s32.totalorder %s25, 0
      %p177 = por %p175, %p176
      %p178 = scmp.ne.s32.totalorder %s166, %s167
      %p179 = scmp.eq.s32.totalorder %s26, 5
      %p180 = por %p178, %p179
      %p182 = scmp.ne.s32.totalorder %s167, %s181
      %p183 = scmp.eq.s32.totalorder %s26, 0
      %p184 = por %p182, %p183
      %s186 = sadd.s32 %s185, 1
      %p189 = scmp.eq.s32.totalorder %s20, 5
      %p190 = scmp.ne.s32.totalorder %s185, %s187
      %p191 = scmp.eq.s32.totalorder %s20, 0
      %p192 = por %p190, %p191
      %p193 = scmp.ne.s32.totalorder %s185, %s187
      %p194 = scmp.eq.s32.totalorder %s25, 5
      %p195 = por %p193, %p194
      %p196 = scmp.ne.s32.totalorder %s187, %s188
      %p197 = scmp.eq.s32.totalorder %s25, 0
      %p198 = por %p196, %p197
      %p199 = scmp.ne.s32.totalorder %s187, %s188
      %p200 = scmp.eq.s32.totalorder %s26, 5
      %p201 = por %p199, %p200
      %p203 = scmp.ne.s32.totalorder %s188, %s202
      %p204 = scmp.eq.s32.totalorder %s26, 0
      %p205 = por %p203, %p204
      %s207 = sadd.s32 %s206, 1
      %p210 = scmp.eq.s32.totalorder %s20, 5
      %p211 = scmp.ne.s32.totalorder %s206, %s208
      %p212 = scmp.eq.s32.totalorder %s20, 0
      %p213 = por %p211, %p212
      %p214 = scmp.ne.s32.totalorder %s206, %s208
      %p215 = scmp.eq.s32.totalorder %s25, 5
      %p216 = por %p214, %p215
      %p217 = scmp.ne.s32.totalorder %s208, %s209
      %p218 = scmp.eq.s32.totalorder %s25, 0
      %p219 = por %p217, %p218
      %p220 = scmp.ne.s32.totalorder %s208, %s209
      %p221 = scmp.eq.s32.totalorder %s26, 5
      %p222 = por %p220, %p221
      %p224 = scmp.ne.s32.totalorder %s209, %s223
      %p225 = scmp.eq.s32.totalorder %s26, 0
      %p226 = por %p224, %p225
      %s228 = sadd.s32 %s227, 1
      %p231 = scmp.eq.s32.totalorder %s20, 5
      %p232 = scmp.ne.s32.totalorder %s227, %s229
      %p233 = scmp.eq.s32.totalorder %s20, 0
      %p234 = por %p232, %p233
      %p235 = scmp.ne.s32.totalorder %s227, %s229
      %p236 = scmp.eq.s32.totalorder %s25, 5
      %p237 = por %p235, %p236
      %p238 = scmp.ne.s32.totalorder %s229, %s230
      %p239 = scmp.eq.s32.totalorder %s25, 0
      %p240 = por %p238, %p239
      %p241 = scmp.ne.s32.totalorder %s229, %s230
      %p242 = scmp.eq.s32.totalorder %s26, 5
      %p243 = por %p241, %p242
      %p245 = scmp.ne.s32.totalorder %s230, %s244
      %p246 = scmp.eq.s32.totalorder %s26, 0
      %p247 = por %p245, %p246
      %s248 = ssub.s32 %s20, %s27
      %p249 = scmp.eq.s32.totalorder %s248, 0
      %s251 = sadd.s32 %s250, 1
      %s252 = scalar_select %p249, %s250, %s251
      %p255 = pneg %p249
      %p256 = scmp.eq.s32.totalorder %s20, 5
      %p257 = por %p255, %p256
      %p258 = scmp.ne.s32.totalorder %s250, %s253
      %p259 = scmp.eq.s32.totalorder %s20, 0
      %p260 = por %p258, %p259
      %p261 = scmp.ne.s32.totalorder %s250, %s253
      %p262 = scmp.eq.s32.totalorder %s25, 5
      %p263 = por %p261, %p262
      %p264 = scmp.ne.s32.totalorder %s253, %s254
      %p265 = scmp.eq.s32.totalorder %s25, 0
      %p266 = por %p264, %p265
      %p267 = scmp.ne.s32.totalorder %s253, %s254
      %p268 = scmp.eq.s32.totalorder %s26, 5
      %p269 = por %p267, %p268
      %p271 = scmp.ne.s32.totalorder %s254, %s270
      %p272 = scmp.eq.s32.totalorder %s26, 0
      %p273 = por %p271, %p272
      %p274 = scmp.le.s32.totalorder 1, %s20
      %p275 = scmp.lt.s32.totalorder %s20, 7
      %p276 = pnand %p274, %p275
      %p277 = pneg %p276
      // Predicated region
      $region9: #{tpu_custom_call.1} parent=5 // pred_check
        _
      $region10: #{tpu_custom_call.1} parent=5 // pred_check_branch
        %279 = sbr.rel (%p276) target = $region12
      $region11: #{tpu_custom_call.1} parent=5 // pred_region
        %s280 = ssub.s32 %s20, 1
        // Predicated region
        $region13: #{tpu_custom_call.1} parent=11 // pred_check
          %p281 = pneg %p93
        $region14: #{tpu_custom_call.1} parent=11 // pred_check_branch
          %283 = sbr.rel (%p281) target = $region16
        $region15: #{tpu_custom_call.1} parent=11 // pred_region
          _
        $region16: #{tpu_custom_call.1} parent=11 // pred_fallthru
          _
        // Predicated region
        $region17: #{tpu_custom_call.1} parent=11 // pred_check
          %p284 = pneg %p114
        $region18: #{tpu_custom_call.1} parent=11 // pred_check_branch
          %286 = sbr.rel (%p284) target = $region20
        $region19: #{tpu_custom_call.1} parent=11 // pred_region
          _
        $region20: #{tpu_custom_call.1} parent=11 // pred_fallthru
          _
        // Predicated region
        $region21: #{tpu_custom_call.1} parent=11 // pred_check
          %p287 = pneg %p135
        $region22: #{tpu_custom_call.1} parent=11 // pred_check_branch
          %289 = sbr.rel (%p287) target = $region24
        $region23: #{tpu_custom_call.1} parent=11 // pred_region
          _
        $region24: #{tpu_custom_call.1} parent=11 // pred_fallthru
          _
        // Predicated region
        $region25: #{tpu_custom_call.1} parent=11 // pred_check
          %p290 = pneg %p156
        $region26: #{tpu_custom_call.1} parent=11 // pred_check_branch
          %292 = sbr.rel (%p290) target = $region28
        $region27: #{tpu_custom_call.1} parent=11 // pred_region
          _
        $region28: #{tpu_custom_call.1} parent=11 // pred_fallthru
          _
        // Predicated region
        $region29: #{tpu_custom_call.1} parent=11 // pred_check
          %p293 = pneg %p177
        $region30: #{tpu_custom_call.1} parent=11 // pred_check_branch
          %295 = sbr.rel (%p293) target = $region32
        $region31: #{tpu_custom_call.1} parent=11 // pred_region
          _
        $region32: #{tpu_custom_call.1} parent=11 // pred_fallthru
          _
        // Predicated region
        $region33: #{tpu_custom_call.1} parent=11 // pred_check
          %p296 = pneg %p198
        $region34: #{tpu_custom_call.1} parent=11 // pred_check_branch
          %298 = sbr.rel (%p296) target = $region36
        $region35: #{tpu_custom_call.1} parent=11 // pred_region
          _
        $region36: #{tpu_custom_call.1} parent=11 // pred_fallthru
          _
        // Predicated region
        $region37: #{tpu_custom_call.1} parent=11 // pred_check
          %p299 = pneg %p219
        $region38: #{tpu_custom_call.1} parent=11 // pred_check_branch
          %301 = sbr.rel (%p299) target = $region40
        $region39: #{tpu_custom_call.1} parent=11 // pred_region
          _
        $region40: #{tpu_custom_call.1} parent=11 // pred_fallthru
          _
        // Predicated region
        $region41: #{tpu_custom_call.1} parent=11 // pred_check
          %p302 = pneg %p240
        $region42: #{tpu_custom_call.1} parent=11 // pred_check_branch
          %304 = sbr.rel (%p302) target = $region44
        $region43: #{tpu_custom_call.1} parent=11 // pred_region
          _
        $region44: #{tpu_custom_call.1} parent=11 // pred_fallthru
          _
      $region12: #{tpu_custom_call.1} parent=5 // pred_fallthru
        _
      %p305 = scmp.lt.s32.totalorder %s20, 6
      // Predicated region
      $region45: #{tpu_custom_call.1} parent=5 // pred_check
        %p306 = pneg %p305
      $region46: #{tpu_custom_call.1} parent=5 // pred_check_branch
        %308 = sbr.rel (%p306) target = $region48
      $region47: #{tpu_custom_call.1} parent=5 // pred_region
        // Predicated region
        $region49: #{tpu_custom_call.1} parent=47 // pred_check
          %p309 = pneg %p40
        $region50: #{tpu_custom_call.1} parent=47 // pred_check_branch
          %311 = sbr.rel (%p309) target = $region52
        $region51: #{tpu_custom_call.1} parent=47 // pred_region
          %p312 = scmp.lt.s32.totalorder %s20, 5
          %s313 = scalar_select %p312, %s20, 5
          %s314 = smul.addr %s313, 4
          %s315 = smul.addr %s314, 4
          %s316 = scalar_lea.vmem %s0, %s315
        $region52: #{tpu_custom_call.1} parent=47 // pred_fallthru
          _
        // Predicated region
        $region53: #{tpu_custom_call.1} parent=47 // pred_check
          %p317 = pneg %p66
        $region54: #{tpu_custom_call.1} parent=47 // pred_check_branch
          %319 = sbr.rel (%p317) target = $region56
        $region55: #{tpu_custom_call.1} parent=47 // pred_region
          %p320 = scmp.lt.s32.totalorder %s20, 5
          %s321 = scalar_select %p320, %s20, 5
          %s322 = scalar_lea.vmem %s1, %s321
        $region56: #{tpu_custom_call.1} parent=47 // pred_fallthru
          _
      $region48: #{tpu_custom_call.1} parent=5 // pred_fallthru
        _
      %p323 = scmp.le.s32.totalorder 1, %s20
      %p324 = scmp.lt.s32.totalorder %s20, 7
      %p325 = pnand %p323, %p324
      %p326 = pneg %p325
      // Predicated region
      $region57: #{tpu_custom_call.1} parent=5 // pred_check
        _
      $region58: #{tpu_custom_call.1} parent=5 // pred_check_branch
        %328 = sbr.rel (%p325) target = $region60
      $region59: #{tpu_custom_call.1} parent=5 // pred_region
        %s329 = ssub.s32 %s20, 1
        %p330 = scmp.lt.s32.totalorder %s25, 5
        %s331 = scalar_select %p330, %s25, 5
        %s332 = smul.addr %s331, 4
        %s333 = smul.addr %s332, 4
        %s334 = scalar_lea.vmem %s0, %s333
        %p335 = pneg %p46
        %p336 = pneg %p43
        %p337 = scmp.lt.s32.totalorder %s25, 5
        %s338 = scalar_select %p337, %s25, 5
        %s339 = scalar_lea.vmem %s1, %s338
        %p340 = pneg %p72
        %p341 = pneg %p69
        %p342 = pneg %p93
        %p343 = pneg %p90
        %p344 = pneg %p114
        %p345 = pneg %p111
        %p346 = pneg %p135
        %p347 = pneg %p132
        %p348 = pneg %p156
        %p349 = pneg %p153
        %p350 = pneg %p177
        %p351 = pneg %p174
        %p352 = pneg %p198
        %p353 = pneg %p195
        %p354 = pneg %p219
        %p355 = pneg %p216
        %p356 = pneg %p240
        %p357 = pneg %p237
        %p358 = pneg %p266
        %p359 = pneg %p263
        %s360 = sand.u32 %s253, 1
        %s361 = scalar_lea.sflag [#allocation4], %s360
        %s362 = sand.u32 %s253, 1
        %s363 = scalar_lea.vmem [#allocation3], %s362
        %p364 = scmp.lt.s32.totalorder %s25, 5
        %s365 = scalar_select %p364, %s25, 5
        %s366 = smul.addr %s365, 4
        %s367 = smul.addr %s366, 4
        %s368 = scalar_lea.vmem %s0, %s367
        %p369 = scmp.lt.s32.totalorder %s25, 5
        %s370 = scalar_select %p369, %s25, 5
        %s371 = scalar_lea.vmem %s1, %s370
        %v373 = vld [vmem:[%s368] sm:$0xf]
        %v374 = vld [vmem:[%s368 + $0x4] sm:$0xf]
        %v375 = vld [vmem:[%s368 + $0x8] sm:$0xf]
        %v376 = vld [vmem:[%s368 + $0xc] sm:$0xf]
        %v377 = vld [vmem:[%s371] sm:$0x1]
        %v378 = vlaneseq
        %v379 = vand.u32 %v378, 127
        %vm380 = vcmp.gt.s32.totalorder %v379, 0
        %v381 = vsel %vm380, 1, 0
        %v382 = vcvt.s32.f32 %v381
        %vm383 = vcmp.lt.s32.totalorder %v379, 15
        %v384 = vsel %vm383, 1, 0
        %v385 = vcvt.s32.f32 %v384
        %v386 = vld [vmem:[%s2] sm:$0xf]
        %v387 = vld [vmem:[%s2 + $0x4] sm:$0xf]
        %v388 = vld [vmem:[%s2 + $0x8] sm:$0xf]
        %v389 = vld [vmem:[%s2 + $0xc] sm:$0xf]
        %v394 = vunpack.c.l.b16 %v386
        %v395 = vunpack.c.l.b16 %v387
        %v396 = vunpack.c.l.b16 %v388
        %v397 = vunpack.c.l.b16 %v389
        %v398 = vpack.c.b16 %v395, %v394
        %v399 = vpack.c.b16 %v397, %v396
        %v404 = vunpack.c.l.b16 %v373
        %v405 = vunpack.c.l.b16 %v374
        %v406 = vunpack.c.l.b16 %v375
        %v407 = vunpack.c.l.b16 %v376
        %v408 = vpack.c.b16 %v405, %v404
        %v409 = vpack.c.b16 %v407, %v406
        %vm412 = vcmask 261120
        %v414 = vsel %vm412, %v398, 0
        %v417 = vsel %vm412, %v399, 0
        %419 = vmatpush.bf16.msra.mxu0 0
        %420 = vmatpush.bf16.msra.mxu0 0
        %421 = vmatpush.bf16.msra.mxu0 0
        %422 = vmatpush.bf16.msra.mxu0 0
        %423 = vmatpush.bf16.msra.mxu0 0
        %424 = vmatpush.bf16.msra.mxu0 0
        %425 = vmatpush.bf16.msra.mxu0 %v409
        %426 = vmatpush.bf16.msra.mxu0 %v408
        %427 = vmatmul.bf16.gmra.mxu0 %v414
        %v428 = vpop.f32.mrf.mxu0
        %v429 = vadd.f32 0.0, %v428
        %v430 = vpop.f32.mrf.mxu0
        %v431 = vadd.f32 0.0, %v430
        %432 = vmatmul.bf16.gmra.mxu0 %v417
        %v433 = vpop.f32.mrf.mxu0
        %v434 = vadd.f32 0.0, %v433
        %v435 = vpop.f32.mrf.mxu0
        %v436 = vadd.f32 0.0, %v435
        %437 = vdwg.mxu0
        %s438 = scalar_lea.vmem %s2, 16
        %v439 = vld [vmem:[%s438] sm:$0xf]
        %v440 = vld [vmem:[%s438 + $0x4] sm:$0xf]
        %v441 = vld [vmem:[%s438 + $0x8] sm:$0xf]
        %v442 = vld [vmem:[%s438 + $0xc] sm:$0xf]
        %v447 = vunpack.c.l.b16 %v439
        %v448 = vunpack.c.l.b16 %v440
        %v449 = vunpack.c.l.b16 %v441
        %v450 = vunpack.c.l.b16 %v442
        %v451 = vpack.c.b16 %v448, %v447
        %v452 = vpack.c.b16 %v450, %v449
        %v454 = vsel %vm412, %v451, 0
        %v457 = vsel %vm412, %v452, 0
        %459 = vmatpush.bf16.msra.mxu0 0
        %460 = vmatpush.bf16.msra.mxu0 0
        %461 = vmatpush.bf16.msra.mxu0 0
        %462 = vmatpush.bf16.msra.mxu0 0
        %463 = vmatpush.bf16.msra.mxu0 0
        %464 = vmatpush.bf16.msra.mxu0 0
        %465 = vmatpush.bf16.msra.mxu0 %v409
        %466 = vmatpush.bf16.msra.mxu0 %v408
        %467 = vmatmul.bf16.gmra.mxu0 %v454
        %v468 = vpop.f32.mrf.mxu0
        %v469 = vadd.f32 0.0, %v468
        %v470 = vpop.f32.mrf.mxu0
        %v471 = vadd.f32 0.0, %v470
        %472 = vmatmul.bf16.gmra.mxu0 %v457
        %v473 = vpop.f32.mrf.mxu0
        %v474 = vadd.f32 0.0, %v473
        %v475 = vpop.f32.mrf.mxu0
        %v476 = vadd.f32 0.0, %v475
        %477 = vdwg.mxu0
        %s478 = scalar_lea.vmem %s2, 32
        %v479 = vld [vmem:[%s478] sm:$0xf]
        %v480 = vld [vmem:[%s478 + $0x4] sm:$0xf]
        %v481 = vld [vmem:[%s478 + $0x8] sm:$0xf]
        %v482 = vld [vmem:[%s478 + $0xc] sm:$0xf]
        %v487 = vunpack.c.l.b16 %v479
        %v488 = vunpack.c.l.b16 %v480
        %v489 = vunpack.c.l.b16 %v481
        %v490 = vunpack.c.l.b16 %v482
        %v491 = vpack.c.b16 %v488, %v487
        %v492 = vpack.c.b16 %v490, %v489
        %v494 = vsel %vm412, %v491, 0
        %v497 = vsel %vm412, %v492, 0
        %499 = vmatpush.bf16.msra.mxu0 0
        %500 = vmatpush.bf16.msra.mxu0 0
        %501 = vmatpush.bf16.msra.mxu0 0
        %502 = vmatpush.bf16.msra.mxu0 0
        %503 = vmatpush.bf16.msra.mxu0 0
        %504 = vmatpush.bf16.msra.mxu0 0
        %505 = vmatpush.bf16.msra.mxu0 %v409
        %506 = vmatpush.bf16.msra.mxu0 %v408
        %507 = vmatmul.bf16.gmra.mxu0 %v494
        %v508 = vpop.f32.mrf.mxu0
        %v509 = vadd.f32 0.0, %v508
        %v510 = vpop.f32.mrf.mxu0
        %v511 = vadd.f32 0.0, %v510
        %512 = vmatmul.bf16.gmra.mxu0 %v497
        %v513 = vpop.f32.mrf.mxu0
        %v514 = vadd.f32 0.0, %v513
        %v515 = vpop.f32.mrf.mxu0
        %v516 = vadd.f32 0.0, %v515
        %517 = vdwg.mxu0
        %518 = vrot.lane.b32.xlu0 %v429, 1
        %v519 = vpop.permute.xlu0 %518
        %520 = vrot.lane.b32.xlu0 %v431, 1
        %v521 = vpop.permute.xlu0 %520
        %522 = vrot.lane.b32.xlu0 %v434, 1
        %v523 = vpop.permute.xlu0 %522
        %524 = vrot.lane.b32.xlu0 %v436, 1
        %v525 = vpop.permute.xlu0 %524
        %v526 = vmul.f32 %v519, %v382
        %v527 = vmul.f32 %v521, %v382
        %v528 = vmul.f32 %v523, %v382
        %v529 = vmul.f32 %v525, %v382
        %v530 = vadd.f32 %v526, %v469
        %v531 = vadd.f32 %v527, %v471
        %v532 = vadd.f32 %v528, %v474
        %v533 = vadd.f32 %v529, %v476
        %534 = vrot.lane.b32.xlu0 %v509, 127
        %v535 = vpop.permute.xlu0 %534
        %536 = vrot.lane.b32.xlu0 %v511, 127
        %v537 = vpop.permute.xlu0 %536
        %538 = vrot.lane.b32.xlu0 %v514, 127
        %v539 = vpop.permute.xlu0 %538
        %540 = vrot.lane.b32.xlu0 %v516, 127
        %v541 = vpop.permute.xlu0 %540
        %v542 = vmul.f32 %v535, %v385
        %v543 = vmul.f32 %v537, %v385
        %v544 = vmul.f32 %v539, %v385
        %v545 = vmul.f32 %v541, %v385
        %v546 = vadd.f32 %v530, %v542
        %v547 = vadd.f32 %v531, %v543
        %v548 = vadd.f32 %v532, %v544
        %v549 = vadd.f32 %v533, %v545
        %v551 = vperm.slane %v377, 0
        %v553 = vmul.f32 %v546, %v551
        %v554 = vmul.f32 %v547, %v551
        %v555 = vmul.f32 %v548, %v551
        %v556 = vmul.f32 %v549, %v551
        %v557 = vld [vmem:[%s3] sm:$0xff]
        %v558 = vld [vmem:[%s3 + $0x8] sm:$0xff]
        %v559 = vld [vmem:[%s3 + $0x10] sm:$0xff]
        %v560 = vld [vmem:[%s3 + $0x18] sm:$0xff]
        %v561 = vld [vmem:[%s4] sm:$0xff]
        %v562 = vld [vmem:[%s4 + $0x8] sm:$0xff]
        %v563 = vld [vmem:[%s4 + $0x10] sm:$0xff]
        %v564 = vld [vmem:[%s4 + $0x18] sm:$0xff]
        %v565 = vadd.f32 %v553, %v554
        %v566 = vadd.f32 %v565, %v555
        %v567 = vadd.f32 %v566, %v556
        %v568 = vrot.slane %v567, 4
        %v569 = vadd.f32 %v567, %v568
        %v570 = vrot.slane %v569, 2
        %v571 = vadd.f32 %v569, %v570
        %v572 = vrot.slane %v571, 1
        %v573 = vadd.f32 %v571, %v572
        %v574 = vrcp.pop 32.0
        %v575 = vmul.f32 32.0, %v574
        %v576 = vsub.f32 1.0, %v575
        %v577 = vmul.f32 %v574, %v576
        %v578 = vadd.f32 %v574, %v577
        %vm579 = vweird.f32 %v574
        %v580 = vsel %vm579, %v574, %v578
        %v581 = vmul.f32 %v573, %v580
        %v582 = vmul.f32 %v553, %v553
        %v583 = vmul.f32 %v554, %v554
        %v584 = vmul.f32 %v555, %v555
        %v585 = vmul.f32 %v556, %v556
        %v586 = vadd.f32 %v582, %v583
        %v587 = vadd.f32 %v586, %v584
        %v588 = vadd.f32 %v587, %v585
        %v589 = vrot.slane %v588, 4
        %v590 = vadd.f32 %v588, %v589
        %v591 = vrot.slane %v590, 2
        %v592 = vadd.f32 %v590, %v591
        %v593 = vrot.slane %v592, 1
        %v594 = vadd.f32 %v592, %v593
        %v595 = vmul.f32 %v594, %v580
        %v596 = vmul.f32 %v581, %v581
        %v597 = vsub.f32 %v595, %v596
        %v598 = vsub.f32 %v553, %v581
        %v599 = vsub.f32 %v554, %v581
        %v600 = vsub.f32 %v555, %v581
        %v601 = vsub.f32 %v556, %v581
        %v602 = vadd.f32 %v597, 1e-05
        %v603 = vrsqrt.pop %v602
        %v604 = vmul.f32 %v603, %v602
        %v605 = vmul.f32 %v604, %v603
        %v606 = vmul.f32 0.5, %v605
        %v607 = vsub.f32 1.5, %v606
        %v608 = vmul.f32 %v603, %v607
        %vm609 = vweird.f32 %v602
        %vm610 = vweird.f32 %v603
        %vm611 = vmor %vm609, %vm610
        %v612 = vsel %vm611, %v603, %v608
        %v613 = vmul.f32 %v598, %v612
        %v614 = vmul.f32 %v599, %v612
        %v615 = vmul.f32 %v600, %v612
        %v616 = vmul.f32 %v601, %v612
        %618 = vset.pattern.permute.xlu0 0
        %619 = vperm.xlu0 %618, %v557
        %v620 = vpop.permute.xlu0 %619
        %623 = vset.pattern.permute.xlu0 0
        %624 = vperm.xlu0 %623, %v558
        %v625 = vpop.permute.xlu0 %624
        %628 = vset.pattern.permute.xlu0 0
        %629 = vperm.xlu0 %628, %v559
        %v630 = vpop.permute.xlu0 %629
        %633 = vset.pattern.permute.xlu0 0
        %634 = vperm.xlu0 %633, %v560
        %v635 = vpop.permute.xlu0 %634
        %v637 = vmul.f32 %v613, %v620
        %v638 = vmul.f32 %v614, %v625
        %v639 = vmul.f32 %v615, %v630
        %v640 = vmul.f32 %v616, %v635
        %642 = vset.pattern.permute.xlu0 0
        %643 = vperm.xlu0 %642, %v561
        %v644 = vpop.permute.xlu0 %643
        %647 = vset.pattern.permute.xlu0 0
        %648 = vperm.xlu0 %647, %v562
        %v649 = vpop.permute.xlu0 %648
        %652 = vset.pattern.permute.xlu0 0
        %653 = vperm.xlu0 %652, %v563
        %v654 = vpop.permute.xlu0 %653
        %657 = vset.pattern.permute.xlu0 0
        %658 = vperm.xlu0 %657, %v564
        %v659 = vpop.permute.xlu0 %658
        %v661 = vadd.f32 %v637, %v644
        %v662 = vadd.f32 %v638, %v649
        %v663 = vadd.f32 %v639, %v654
        %v664 = vadd.f32 %v640, %v659
        %v665 = vmax.f32 %v661, 0.0
        %v666 = vmax.f32 %v662, 0.0
        %v667 = vmax.f32 %v663, 0.0
        %v668 = vmax.f32 %v664, 0.0
        %v669 = vpack.c.bf16 %v666, %v665
        %v670 = vpack.c.bf16 %v668, %v667
        %v671 = vld [vmem:[%s5] sm:$0xf]
        %v672 = vld [vmem:[%s5 + $0x4] sm:$0xf]
        %v673 = vld [vmem:[%s5 + $0x8] sm:$0xf]
        %v674 = vld [vmem:[%s5 + $0xc] sm:$0xf]
        %v679 = vunpack.c.l.b16 %v671
        %v680 = vunpack.c.l.b16 %v672
        %v681 = vunpack.c.l.b16 %v673
        %v682 = vunpack.c.l.b16 %v674
        %v683 = vpack.c.b16 %v680, %v679
        %v684 = vpack.c.b16 %v682, %v681
        %v686 = vsel %vm412, %v683, 0
        %v689 = vsel %vm412, %v684, 0
        %691 = vmatpush.bf16.msra.mxu0 0
        %692 = vmatpush.bf16.msra.mxu0 0
        %693 = vmatpush.bf16.msra.mxu0 0
        %694 = vmatpush.bf16.msra.mxu0 0
        %695 = vmatpush.bf16.msra.mxu0 0
        %696 = vmatpush.bf16.msra.mxu0 0
        %697 = vmatpush.bf16.msra.mxu0 %v670
        %698 = vmatpush.bf16.msra.mxu0 %v669
        %699 = vmatmul.bf16.gmra.mxu0 %v686
        %v700 = vpop.f32.mrf.mxu0
        %v701 = vadd.f32 0.0, %v700
        %v702 = vpop.f32.mrf.mxu0
        %v703 = vadd.f32 0.0, %v702
        %704 = vmatmul.bf16.gmra.mxu0 %v689
        %v705 = vpop.f32.mrf.mxu0
        %v706 = vadd.f32 0.0, %v705
        %v707 = vpop.f32.mrf.mxu0
        %v708 = vadd.f32 0.0, %v707
        %709 = vdwg.mxu0
        %s710 = scalar_lea.vmem %s5, 16
        %v711 = vld [vmem:[%s710] sm:$0xf]
        %v712 = vld [vmem:[%s710 + $0x4] sm:$0xf]
        %v713 = vld [vmem:[%s710 + $0x8] sm:$0xf]
        %v714 = vld [vmem:[%s710 + $0xc] sm:$0xf]
        %v719 = vunpack.c.l.b16 %v711
        %v720 = vunpack.c.l.b16 %v712
        %v721 = vunpack.c.l.b16 %v713
        %v722 = vunpack.c.l.b16 %v714
        %v723 = vpack.c.b16 %v720, %v719
        %v724 = vpack.c.b16 %v722, %v721
        %v726 = vsel %vm412, %v723, 0
        %v729 = vsel %vm412, %v724, 0
        %731 = vmatpush.bf16.msra.mxu0 0
        %732 = vmatpush.bf16.msra.mxu0 0
        %733 = vmatpush.bf16.msra.mxu0 0
        %734 = vmatpush.bf16.msra.mxu0 0
        %735 = vmatpush.bf16.msra.mxu0 0
        %736 = vmatpush.bf16.msra.mxu0 0
        %737 = vmatpush.bf16.msra.mxu0 %v670
        %738 = vmatpush.bf16.msra.mxu0 %v669
        %739 = vmatmul.bf16.gmra.mxu0 %v726
        %v740 = vpop.f32.mrf.mxu0
        %v741 = vadd.f32 0.0, %v740
        %v742 = vpop.f32.mrf.mxu0
        %v743 = vadd.f32 0.0, %v742
        %744 = vmatmul.bf16.gmra.mxu0 %v729
        %v745 = vpop.f32.mrf.mxu0
        %v746 = vadd.f32 0.0, %v745
        %v747 = vpop.f32.mrf.mxu0
        %v748 = vadd.f32 0.0, %v747
        %749 = vdwg.mxu0
        %s750 = scalar_lea.vmem %s5, 32
        %v751 = vld [vmem:[%s750] sm:$0xf]
        %v752 = vld [vmem:[%s750 + $0x4] sm:$0xf]
        %v753 = vld [vmem:[%s750 + $0x8] sm:$0xf]
        %v754 = vld [vmem:[%s750 + $0xc] sm:$0xf]
        %v759 = vunpack.c.l.b16 %v751
        %v760 = vunpack.c.l.b16 %v752
        %v761 = vunpack.c.l.b16 %v753
        %v762 = vunpack.c.l.b16 %v754
        %v763 = vpack.c.b16 %v760, %v759
        %v764 = vpack.c.b16 %v762, %v761
        %v766 = vsel %vm412, %v763, 0
        %v769 = vsel %vm412, %v764, 0
        %771 = vmatpush.bf16.msra.mxu0 0
        %772 = vmatpush.bf16.msra.mxu0 0
        %773 = vmatpush.bf16.msra.mxu0 0
        %774 = vmatpush.bf16.msra.mxu0 0
        %775 = vmatpush.bf16.msra.mxu0 0
        %776 = vmatpush.bf16.msra.mxu0 0
        %777 = vmatpush.bf16.msra.mxu0 %v670
        %778 = vmatpush.bf16.msra.mxu0 %v669
        %779 = vmatmul.bf16.gmra.mxu0 %v766
        %v780 = vpop.f32.mrf.mxu0
        %v781 = vadd.f32 0.0, %v780
        %v782 = vpop.f32.mrf.mxu0
        %v783 = vadd.f32 0.0, %v782
        %784 = vmatmul.bf16.gmra.mxu0 %v769
        %v785 = vpop.f32.mrf.mxu0
        %v786 = vadd.f32 0.0, %v785
        %v787 = vpop.f32.mrf.mxu0
        %v788 = vadd.f32 0.0, %v787
        %789 = vdwg.mxu0
        %790 = vrot.lane.b32.xlu0 %v701, 1
        %v791 = vpop.permute.xlu0 %790
        %792 = vrot.lane.b32.xlu0 %v703, 1
        %v793 = vpop.permute.xlu0 %792
        %794 = vrot.lane.b32.xlu0 %v706, 1
        %v795 = vpop.permute.xlu0 %794
        %796 = vrot.lane.b32.xlu0 %v708, 1
        %v797 = vpop.permute.xlu0 %796
        %v798 = vmul.f32 %v791, %v382
        %v799 = vmul.f32 %v793, %v382
        %v800 = vmul.f32 %v795, %v382
        %v801 = vmul.f32 %v797, %v382
        %v802 = vadd.f32 %v798, %v741
        %v803 = vadd.f32 %v799, %v743
        %v804 = vadd.f32 %v800, %v746
        %v805 = vadd.f32 %v801, %v748
        %806 = vrot.lane.b32.xlu0 %v781, 127
        %v807 = vpop.permute.xlu0 %806
        %808 = vrot.lane.b32.xlu0 %v783, 127
        %v809 = vpop.permute.xlu0 %808
        %810 = vrot.lane.b32.xlu0 %v786, 127
        %v811 = vpop.permute.xlu0 %810
        %812 = vrot.lane.b32.xlu0 %v788, 127
        %v813 = vpop.permute.xlu0 %812
        %v814 = vmul.f32 %v807, %v385
        %v815 = vmul.f32 %v809, %v385
        %v816 = vmul.f32 %v811, %v385
        %v817 = vmul.f32 %v813, %v385
        %v818 = vadd.f32 %v802, %v814
        %v819 = vadd.f32 %v803, %v815
        %v820 = vadd.f32 %v804, %v816
        %v821 = vadd.f32 %v805, %v817
        %v822 = vmul.f32 %v818, %v551
        %v823 = vmul.f32 %v819, %v551
        %v824 = vmul.f32 %v820, %v551
        %v825 = vmul.f32 %v821, %v551
        %v826 = vld [vmem:[%s6] sm:$0xff]
        %v827 = vld [vmem:[%s6 + $0x8] sm:$0xff]
        %v828 = vld [vmem:[%s6 + $0x10] sm:$0xff]
        %v829 = vld [vmem:[%s6 + $0x18] sm:$0xff]
        %v830 = vld [vmem:[%s7] sm:$0xff]
        %v831 = vld [vmem:[%s7 + $0x8] sm:$0xff]
        %v832 = vld [vmem:[%s7 + $0x10] sm:$0xff]
        %v833 = vld [vmem:[%s7 + $0x18] sm:$0xff]
        %v834 = vadd.f32 %v822, %v823
        %v835 = vadd.f32 %v834, %v824
        %v836 = vadd.f32 %v835, %v825
        %v837 = vrot.slane %v836, 4
        %v838 = vadd.f32 %v836, %v837
        %v839 = vrot.slane %v838, 2
        %v840 = vadd.f32 %v838, %v839
        %v841 = vrot.slane %v840, 1
        %v842 = vadd.f32 %v840, %v841
        %v843 = vmul.f32 %v842, %v580
        %v844 = vmul.f32 %v822, %v822
        %v845 = vmul.f32 %v823, %v823
        %v846 = vmul.f32 %v824, %v824
        %v847 = vmul.f32 %v825, %v825
        %v848 = vadd.f32 %v844, %v845
        %v849 = vadd.f32 %v848, %v846
        %v850 = vadd.f32 %v849, %v847
        %v851 = vrot.slane %v850, 4
        %v852 = vadd.f32 %v850, %v851
        %v853 = vrot.slane %v852, 2
        %v854 = vadd.f32 %v852, %v853
        %v855 = vrot.slane %v854, 1
        %v856 = vadd.f32 %v854, %v855
        %v857 = vmul.f32 %v856, %v580
        %v858 = vmul.f32 %v843, %v843
        %v859 = vsub.f32 %v857, %v858
        %v860 = vsub.f32 %v822, %v843
        %v861 = vsub.f32 %v823, %v843
        %v862 = vsub.f32 %v824, %v843
        %v863 = vsub.f32 %v825, %v843
        %v864 = vadd.f32 %v859, 1e-05
        %v865 = vrsqrt.pop %v864
        %v866 = vmul.f32 %v865, %v864
        %v867 = vmul.f32 %v866, %v865
        %v868 = vmul.f32 0.5, %v867
        %v869 = vsub.f32 1.5, %v868
        %v870 = vmul.f32 %v865, %v869
        %vm871 = vweird.f32 %v864
        %vm872 = vweird.f32 %v865
        %vm873 = vmor %vm871, %vm872
        %v874 = vsel %vm873, %v865, %v870
        %v875 = vmul.f32 %v860, %v874
        %v876 = vmul.f32 %v861, %v874
        %v877 = vmul.f32 %v862, %v874
        %v878 = vmul.f32 %v863, %v874
        %880 = vset.pattern.permute.xlu0 0
        %881 = vperm.xlu0 %880, %v826
        %v882 = vpop.permute.xlu0 %881
        %885 = vset.pattern.permute.xlu0 0
        %886 = vperm.xlu0 %885, %v827
        %v887 = vpop.permute.xlu0 %886
        %890 = vset.pattern.permute.xlu0 0
        %891 = vperm.xlu0 %890, %v828
        %v892 = vpop.permute.xlu0 %891
        %895 = vset.pattern.permute.xlu0 0
        %896 = vperm.xlu0 %895, %v829
        %v897 = vpop.permute.xlu0 %896
        %v899 = vmul.f32 %v875, %v882
        %v900 = vmul.f32 %v876, %v887
        %v901 = vmul.f32 %v877, %v892
        %v902 = vmul.f32 %v878, %v897
        %904 = vset.pattern.permute.xlu0 0
        %905 = vperm.xlu0 %904, %v830
        %v906 = vpop.permute.xlu0 %905
        %909 = vset.pattern.permute.xlu0 0
        %910 = vperm.xlu0 %909, %v831
        %v911 = vpop.permute.xlu0 %910
        %914 = vset.pattern.permute.xlu0 0
        %915 = vperm.xlu0 %914, %v832
        %v916 = vpop.permute.xlu0 %915
        %919 = vset.pattern.permute.xlu0 0
        %920 = vperm.xlu0 %919, %v833
        %v921 = vpop.permute.xlu0 %920
        %v923 = vadd.f32 %v899, %v906
        %v924 = vadd.f32 %v900, %v911
        %v925 = vadd.f32 %v901, %v916
        %v926 = vadd.f32 %v902, %v921
        %v927 = vmax.f32 %v923, 0.0
        %v928 = vmax.f32 %v924, 0.0
        %v929 = vmax.f32 %v925, 0.0
        %v930 = vmax.f32 %v926, 0.0
        %v931 = vld [vmem:[%s8] sm:$0xff]
        %v932 = vld [vmem:[%s8 + $0x8] sm:$0xff]
        %v933 = vld [vmem:[%s8 + $0x10] sm:$0xff]
        %v934 = vld [vmem:[%s8 + $0x18] sm:$0xff]
        %936 = vset.pattern.permute.xlu0 0
        %937 = vperm.xlu0 %936, %v931
        %v938 = vpop.permute.xlu0 %937
        %941 = vset.pattern.permute.xlu0 0
        %942 = vperm.xlu0 %941, %v932
        %v943 = vpop.permute.xlu0 %942
        %946 = vset.pattern.permute.xlu0 0
        %947 = vperm.xlu0 %946, %v933
        %v948 = vpop.permute.xlu0 %947
        %951 = vset.pattern.permute.xlu0 0
        %952 = vperm.xlu0 %951, %v934
        %v953 = vpop.permute.xlu0 %952
        %v955 = vmul.f32 %v927, %v938
        %v956 = vmul.f32 %v928, %v943
        %v957 = vmul.f32 %v929, %v948
        %v958 = vmul.f32 %v930, %v953
        %v959 = vadd.f32 %v955, %v956
        %v960 = vadd.f32 %v959, %v957
        %v961 = vadd.f32 %v960, %v958
        %v962 = vrot.slane %v961, 4
        %v963 = vadd.f32 %v961, %v962
        %v964 = vrot.slane %v963, 2
        %v965 = vadd.f32 %v963, %v964
        %v966 = vrot.slane %v965, 1
        %v967 = vadd.f32 %v965, %v966
        %s968 = scalar_lea.vmem %s8, 32
        %v969 = vld [vmem:[%s968] sm:$0xff]
        %v970 = vld [vmem:[%s968 + $0x8] sm:$0xff]
        %v971 = vld [vmem:[%s968 + $0x10] sm:$0xff]
        %v972 = vld [vmem:[%s968 + $0x18] sm:$0xff]
        %974 = vset.pattern.permute.xlu0 0
        %975 = vperm.xlu0 %974, %v969
        %v976 = vpop.permute.xlu0 %975
        %979 = vset.pattern.permute.xlu0 0
        %980 = vperm.xlu0 %979, %v970
        %v981 = vpop.permute.xlu0 %980
        %984 = vset.pattern.permute.xlu0 0
        %985 = vperm.xlu0 %984, %v971
        %v986 = vpop.permute.xlu0 %985
        %989 = vset.pattern.permute.xlu0 0
        %990 = vperm.xlu0 %989, %v972
        %v991 = vpop.permute.xlu0 %990
        %v993 = vmul.f32 %v927, %v976
        %v994 = vmul.f32 %v928, %v981
        %v995 = vmul.f32 %v929, %v986
        %v996 = vmul.f32 %v930, %v991
        %v997 = vadd.f32 %v993, %v994
        %v998 = vadd.f32 %v997, %v995
        %v999 = vadd.f32 %v998, %v996
        %v1000 = vrot.slane %v999, 4
        %v1001 = vadd.f32 %v999, %v1000
        %v1002 = vrot.slane %v1001, 2
        %v1003 = vadd.f32 %v1001, %v1002
        %v1004 = vrot.slane %v1003, 1
        %v1005 = vadd.f32 %v1003, %v1004
        %s1006 = scalar_lea.vmem %s8, 64
        %v1007 = vld [vmem:[%s1006] sm:$0xff]
        %v1008 = vld [vmem:[%s1006 + $0x8] sm:$0xff]
        %v1009 = vld [vmem:[%s1006 + $0x10] sm:$0xff]
        %v1010 = vld [vmem:[%s1006 + $0x18] sm:$0xff]
        %1012 = vset.pattern.permute.xlu0 0
        %1013 = vperm.xlu0 %1012, %v1007
        %v1014 = vpop.permute.xlu0 %1013
        %1017 = vset.pattern.permute.xlu0 0
        %1018 = vperm.xlu0 %1017, %v1008
        %v1019 = vpop.permute.xlu0 %1018
        %1022 = vset.pattern.permute.xlu0 0
        %1023 = vperm.xlu0 %1022, %v1009
        %v1024 = vpop.permute.xlu0 %1023
        %1027 = vset.pattern.permute.xlu0 0
        %1028 = vperm.xlu0 %1027, %v1010
        %v1029 = vpop.permute.xlu0 %1028
        %v1031 = vmul.f32 %v927, %v1014
        %v1032 = vmul.f32 %v928, %v1019
        %v1033 = vmul.f32 %v929, %v1024
        %v1034 = vmul.f32 %v930, %v1029
        %v1035 = vadd.f32 %v1031, %v1032
        %v1036 = vadd.f32 %v1035, %v1033
        %v1037 = vadd.f32 %v1036, %v1034
        %v1038 = vrot.slane %v1037, 4
        %v1039 = vadd.f32 %v1037, %v1038
        %v1040 = vrot.slane %v1039, 2
        %v1041 = vadd.f32 %v1039, %v1040
        %v1042 = vrot.slane %v1041, 1
        %v1043 = vadd.f32 %v1041, %v1042
        %1044 = vrot.lane.b32.xlu0 %v967, 1
        %v1045 = vpop.permute.xlu0 %1044
        %v1046 = vmul.f32 %v1045, %v382
        %v1047 = vadd.f32 %v1046, %v1005
        %1048 = vrot.lane.b32.xlu0 %v1043, 127
        %v1049 = vpop.permute.xlu0 %1048
        %v1050 = vmul.f32 %v1049, %v385
        %v1051 = vadd.f32 %v1047, %v1050
        %s1052 = sld [smem:[#allocation2]]
        %v1053 = vstv %s1052
        %v1054 = vadd.f32 %v1051, %v1053
        %v1055 = vmul.f32 %v1054, %v377
        %1056 = vst [vmem:[%s363] sm:$0x1] %v1055
        %s1057 = sand.u32 %s253, 1
        %s1058 = scalar_lea.sflag [#allocation4], %s1057
        %s1059 = sand.u32 %s253, 1
        %s1060 = scalar_lea.vmem [#allocation3], %s1059
        // Predicated region
        $region61: #{tpu_custom_call.1} parent=59 // pred_check
          %p1061 = pneg %p263
        $region62: #{tpu_custom_call.1} parent=59 // pred_check_branch
          %1063 = sbr.rel (%p1061) target = $region64
        $region63: #{tpu_custom_call.1} parent=59 // pred_region
          %1065 = vsyncadd %s1058, 0
          %s1066 = scalar_lea.hbm %s10, %s25
          %s1068 = sshll.u32 %s1060, 4
          %s1069 = int_to_ptr.vmem [resolvable:$true] %s1068
          %s1070 = sshll.u32 %s1066, 4
          %s1071 = int_to_ptr.hbm [resolvable:$true] %s1070
          %1073 = dma.vmem_to_hbm [thread:$0]  %s1069, 16, %s1071, %s1058
        $region64: #{tpu_custom_call.1} parent=59 // pred_fallthru
          _
      $region60: #{tpu_custom_call.1} parent=5 // pred_fallthru
        _
      %p1074 = scmp.le.s32.totalorder 2, %s20
      // Predicated region
      $region65: #{tpu_custom_call.1} parent=5 // pred_check
        %p1075 = pneg %p1074
      $region66: #{tpu_custom_call.1} parent=5 // pred_check_branch
        %1077 = sbr.rel (%p1075) target = $region68
      $region67: #{tpu_custom_call.1} parent=5 // pred_region
        %s1078 = ssub.s32 %s20, 2
        // Predicated region
        $region69: #{tpu_custom_call.1} parent=67 // pred_check
          %p1079 = pneg %p269
        $region70: #{tpu_custom_call.1} parent=67 // pred_check_branch
          %1081 = sbr.rel (%p1079) target = $region72
        $region71: #{tpu_custom_call.1} parent=67 // pred_region
          %s1082 = sand.u32 %s254, 1
          %s1083 = scalar_lea.sflag [#allocation4], %s1082
          %s1084 = sand.u32 %s254, 1
          %s1085 = scalar_lea.vmem [#allocation3], %s1084
          %1087 = dma.done %s1083, 16
        $region72: #{tpu_custom_call.1} parent=67 // pred_fallthru
          _
      $region68: #{tpu_custom_call.1} parent=5 // pred_fallthru
        _
    $region6: #{tpu_custom_call.1} parent=1 // loop_footer
      %s24 = sadd.s32 1, %s20
    $region7: #{tpu_custom_call.1} parent=1 // loop_footer_branch
      %19 = sbr.rel target = $region3
    $region8: #{tpu_custom_call.1} parent=1 // loop_exit
      _
    %1088 = vsyncpa [#allocation4], 1
    %s1089 = scalar_lea.sflag [#allocation4], 1
    %1090 = vsyncpa %s1089, 1

</llo_original>
